<compile_context>
chip_gen: v7x
topology: tpu7x:2x2x1
jax: 0.10.0
libtpu: 0.0.40
codegen_flags: <defaults>
</compile_context>

<pallas_src>
import functools

import jax
import jax.numpy as jnp
from jax import lax
from jax.experimental import pallas as pl
from jax.experimental.pallas import tpu as pltpu


def _row_stats_kernel(x_ref, mean_ref, var_ref):
    """Per-row mean / unbiased variance of one (R, HW) block (rows are (n, c) pairs)."""
    xf = x_ref[...].astype(jnp.float32)                          # (R, HW)
    hw = xf.shape[-1]
    mean = jnp.sum(xf, axis=-1, keepdims=True) * (1.0 / hw)      # (R, 1)
    d = xf - mean                                                # two-pass var on resident block
    var = jnp.sum(d * d, axis=-1, keepdims=True) * (1.0 / max(hw - 1, 1))
    mean_ref[...] = mean
    var_ref[...] = var


def _affine_kernel(x_ref, c_mean_ref, c_var_ref, s_mean_ref, s_var_ref, o_ref, *, eps):
    """out = (x - c_mean) / c_std * s_std + s_mean, computed as x * scale + shift in f32."""
    xf = x_ref[...].astype(jnp.float32)                          # (R, HW)
    c_mean = c_mean_ref[...]                                     # (R, 1) f32
    c_var = c_var_ref[...]
    s_mean = s_mean_ref[...]
    s_var = s_var_ref[...]
    scale = jnp.sqrt(s_var + eps) * lax.rsqrt(c_var + eps)       # (R, 1), EUP sqrt/rsqrt
    shift = s_mean - c_mean * scale                              # (R, 1), f32 (no bf16 quantization)
    o_ref[...] = (xf * scale + shift).astype(o_ref.dtype)        # single cast at the store


def _choose_row_block(nc, hw, itemsize, target_bytes=2 << 20):
    """Largest row count R that divides N*C, is a multiple of the dtype-aware sublane
    multiple (8 for f32, 16 for bf16, 32 for int8/fp8), and keeps one (R, HW) block at or
    below ~2 MiB. Falls back to the full N*C extent when no aligned divisor exists."""
    sub = {1: 32, 2: 16, 4: 8}.get(itemsize, 8)
    divs = [d for d in range(sub, nc + 1, sub) if nc % d == 0]
    if not divs:
        return nc                       # full second-minor extent (allowed by BlockSpec rules)
    fit = [d for d in divs if d * hw * itemsize <= target_bytes]
    return max(fit) if fit else min(divs)


def cross_instance_norm_mix_pallas(x, ins_idxs, eps=1e-5):
    """out[n] = instance_norm_mix(content=x[n], style=x[ins_idxs[n]]); x is NCHW."""
    N, C, H, W = x.shape
    HW = H * W
    NC = N * C
    itemsize = jnp.dtype(x.dtype).itemsize

    x2d = x.reshape(NC, HW)                 # contiguous -> free reshape, no copy
    R = _choose_row_block(NC, HW, itemsize)
    grid = (NC // R,)

    # TODO(synk): when H*W is not a multiple of 128 (e.g. 7x7 late-stage maps) output stores
    # are masked (vst.msk); making them lane-dense needs a padded / NHWC copy of x that would
    # cost more HBM traffic than it saves here, so it is left to the caller's layout choice.
    # TODO(synk): a further ~1.5x (3 -> ~2 HBM passes) is possible by carrying content stats
    # along permutation cycles in a single kernel, but that forces per-batch blocks and loses
    # the large row-blocking that dominates for small C*H*W feature maps.
    cparams = pltpu.CompilerParams(
        dimension_semantics=("parallel",),
        # affine kernel keeps ~4 double-buffered 2 MiB blocks resident; raise v5e's 16 MiB
        # scoped default, still well inside v6e (128 MiB) / v7x (64 MiB per TC) physical VMEM.
        vmem_limit_bytes=32 << 20,
    )

    stats_cost = pl.CostEstimate(
        flops=int(4 * NC * HW),
        transcendentals=0,
        bytes_accessed=int(NC * HW * itemsize + 2 * NC * 4),
    )
    mean, var = pl.pallas_call(
        _row_stats_kernel,
        out_shape=(jax.ShapeDtypeStruct((NC, 1), jnp.float32),
                   jax.ShapeDtypeStruct((NC, 1), jnp.float32)),
        grid=grid,
        in_specs=[pl.BlockSpec((R, HW), lambda i: (i, 0))],
        out_specs=(pl.BlockSpec((R, 1), lambda i: (i, 0)),
                   pl.BlockSpec((R, 1), lambda i: (i, 0))),
        compiler_params=cparams,
        cost_estimate=stats_cost,
    )(x2d)

    # Batch permutation applied only to the tiny per-(n, c) stats (O(N*C) bytes, XLA glue);
    # the feature map itself is never gathered or streamed in permuted order.
    ins_idxs = ins_idxs.astype(jnp.int32)
    s_mean = mean.reshape(N, C)[ins_idxs].reshape(NC, 1)
    s_var = var.reshape(N, C)[ins_idxs].reshape(NC, 1)

    affine_cost = pl.CostEstimate(
        flops=int(2 * NC * HW + 4 * NC),
        transcendentals=int(2 * NC),
        bytes_accessed=int(2 * NC * HW * itemsize + 4 * NC * 4),
    )
    out2d = pl.pallas_call(
        functools.partial(_affine_kernel, eps=eps),
        out_shape=jax.ShapeDtypeStruct((NC, HW), x.dtype),
        grid=grid,
        in_specs=[pl.BlockSpec((R, HW), lambda i: (i, 0)),
                  pl.BlockSpec((R, 1), lambda i: (i, 0)),
                  pl.BlockSpec((R, 1), lambda i: (i, 0)),
                  pl.BlockSpec((R, 1), lambda i: (i, 0)),
                  pl.BlockSpec((R, 1), lambda i: (i, 0))],
        out_specs=pl.BlockSpec((R, HW), lambda i: (i, 0)),
        compiler_params=cparams,
        cost_estimate=affine_cost,
    )(x2d, mean, var, s_mean, s_var)

    return out2d.reshape(N, C, H, W)


def cross_norm_forward(x, key, *, training=True, active=True):
    """CrossNorm.forward for crop='neither', chan=False, lam=None.

    When not (training and active) it is the identity, matching the PyTorch module.
    """
    if not (training and active):
        return x
    N = x.shape[0]
    # torch.randperm(x.size(0)) equivalent (deterministic via JAX key) -- glue.
    ins_idxs = jax.random.permutation(key, N)
    # TODO(synk): crop in ['style','content','both'] uses host-side rejection-sampled random
    # bboxes (cn_rand_bbox), chan=True shuffles channels, lam!=None blends; only the
    # crop='neither', chan=False, lam=None path is implemented here.
    return cross_instance_norm_mix_pallas(x, ins_idxs)


def _reference(content, style):
    """Pure-JAX reference of instance_norm_mix (torch-style, unbiased var) for sanity check."""
    eps = 1e-5
    N, C = content.shape[:2]
    c = content.reshape(N, C, -1)
    s = style.reshape(N, C, -1)
    c_mean = c.mean(-1)[..., None, None]
    s_mean = s.mean(-1)[..., None, None]
    c_std = jnp.sqrt(c.var(-1, ddof=1) + eps)[..., None, None]
    s_std = jnp.sqrt(s.var(-1, ddof=1) + eps)[..., None, None]
    return (content - c_mean) / c_std * s_std + s_mean


if __name__ == "__main__":
    key = jax.random.PRNGKey(0)
    kx, kperm = jax.random.split(key)

    # NCHW input, small shapes.
    N, C, H, W = 2, 4, 16, 16
    x = jax.random.normal(kx, (N, C, H, W), dtype=jnp.float32)

    out = cross_norm_forward(x, kperm, training=True, active=True)
    out = jax.block_until_ready(out)

    # Check against a pure-JAX reference of the same math (reference does the gather in XLA;
    # the kernels only ever gather the tiny per-(n,c) statistics).
    ins_idxs = jax.random.permutation(kperm, N)
    ref = _reference(x, x[ins_idxs])
    assert out.shape == x.shape and out.dtype == x.dtype
    assert jnp.allclose(out, ref, atol=1e-4, rtol=1e-4)

    print("KERNEL_OK")
</pallas_src>

<mosaic_0001>
module attributes {stable_mosaic.version = 11 : i64} {
  func.func @_row_stats_kernel(%arg0: i32, %arg1: memref<8x256xf32, #tpu.memory_space<vmem>>, %arg2: memref<8x1xf32, #tpu.memory_space<vmem>>, %arg3: memref<8x1xf32, #tpu.memory_space<vmem>>) attributes {dimension_semantics = [#tpu.dimension_semantics<parallel>], iteration_bounds = array<i64: 1>, scalar_prefetch = 0 : i64, scratch_operands = 0 : i64, tpu.core_type = #tpu.core_type<tc>, window_params = [{transform_indices = @transform_0, window_bounds = array<i64: 8, 256>}, {transform_indices = @transform_1, window_bounds = array<i64: 8, 1>}, {transform_indices = @transform_2, window_bounds = array<i64: 8, 1>}]} {
    %c0 = arith.constant 0 : index
    %c0_0 = arith.constant 0 : index
    %0 = vector.load %arg1[%c0, %c0_0] : memref<8x256xf32, #tpu.memory_space<vmem>>, vector<8x256xf32>
    %cst = arith.constant dense<0.000000e+00> : vector<8xf32>
    %1 = vector.multi_reduction <add>, %0, %cst [1] : vector<8x256xf32> to vector<8xf32>
    %2 = vector.shape_cast %1 : vector<8xf32> to vector<8x1xf32>
    %cst_1 = arith.constant 3.906250e-03 : f32
    %3 = vector.broadcast %cst_1 : f32 to vector<8x1xf32>
    %4 = arith.mulf %2, %3 : vector<8x1xf32>
    %5 = vector.broadcast %4 : vector<8x1xf32> to vector<8x256xf32>
    %6 = arith.subf %0, %5 : vector<8x256xf32>
    %7 = arith.mulf %6, %6 : vector<8x256xf32>
    %cst_2 = arith.constant dense<0.000000e+00> : vector<8xf32>
    %8 = vector.multi_reduction <add>, %7, %cst_2 [1] : vector<8x256xf32> to vector<8xf32>
    %9 = vector.shape_cast %8 : vector<8xf32> to vector<8x1xf32>
    %cst_3 = arith.constant 0.00392156886 : f32
    %10 = vector.broadcast %cst_3 : f32 to vector<8x1xf32>
    %11 = arith.mulf %9, %10 : vector<8x1xf32>
    %c0_4 = arith.constant 0 : index
    %c0_5 = arith.constant 0 : index
    %12 = vector.load %arg2[%c0_4, %c0_5] : memref<8x1xf32, #tpu.memory_space<vmem>>, vector<8x1xf32>
    tpu.vector_store %arg2[%c0_4, %c0_5], %4 {strides = array<i32>} : memref<8x1xf32, #tpu.memory_space<vmem>>, vector<8x1xf32>,
    %c0_6 = arith.constant 0 : index
    %c0_7 = arith.constant 0 : index
    %13 = vector.load %arg3[%c0_6, %c0_7] : memref<8x1xf32, #tpu.memory_space<vmem>>, vector<8x1xf32>
    tpu.vector_store %arg3[%c0_6, %c0_7], %11 {strides = array<i32>} : memref<8x1xf32, #tpu.memory_space<vmem>>, vector<8x1xf32>,
    return
  }
  func.func @transform_0(%arg0: i32) -> (i32, i32) {
    %c0_i32 = arith.constant 0 : i32
    %c0_i32_0 = arith.constant 0 : i32
    return %arg0, %c0_i32 : i32, i32
  }
  func.func @transform_1(%arg0: i32) -> (i32, i32) {
    %c0_i32 = arith.constant 0 : i32
    %c0_i32_0 = arith.constant 0 : i32
    return %arg0, %c0_i32 : i32, i32
  }
  func.func @transform_2(%arg0: i32) -> (i32, i32) {
    %c0_i32 = arith.constant 0 : i32
    %c0_i32_0 = arith.constant 0 : i32
    return %arg0, %c0_i32 : i32, i32
  }
}

</mosaic_0001>

<llo_original>
// kernel: tpu_custom_call.1
$region0: #{tpu_custom_call.1}
  #allocation0 [shape = 'u32[]', space=smem, size = 0x4, offset = 0x4, fixed_abs, tag = 'smem constant byte address 0x4 - core index']
  #allocation1 [shape = 'u32[144,128]{1,0:T(1,128)}', space=vmem, size = 0x12000, scoped, tag = 'internal scratch']
  %s0 = inlined_call_operand.hbm [shape: f32[8,256], index: 0, kind: input, shape index: {}]
  %s1 = inlined_call_operand.vmem [shape: f32[8,1], index: 1, kind: output, shape index: {0}]
  %s2 = inlined_call_operand.vmem [shape: f32[8,1], index: 2, kind: output, shape index: {1}]
  %3 = xla_tuple %s1, %s2
  %s4 = sld [smem:[#allocation0]]
  $region26: #{tpu_custom_call.1} parent=0
    _
  %s6 = ssub.s32 1, %s4
  %s7 = scalar_select 0, %s6, %s4
  $region1: #{tpu_custom_call.1} parent=0
    #allocation2 [shape = 'u8[8192]{0}', space=vmem, size = 0x2000, scoped, tag = 'input window, operand 0, single buffered']
    #allocation3 [shape = 's32[1]{0}', space=sflag, size = 0x4, scoped, tag = 'scoped memory for tpu_custom_call.1']
    %8 = vsyncpa [#allocation3], 0
    // Predicated region
    $region2: #{tpu_custom_call.1} parent=1 // pred_check
      _
    $region3: #{tpu_custom_call.1} parent=1 // pred_check_branch
      %10 = sbr.rel (0) target = $region5
    $region4: #{tpu_custom_call.1} parent=1 // pred_region
      %s12 = ssub.s32 256, 256
      %13 = vsyncadd [#allocation3], %s12
      %s15 = sshll.u32 [#allocation2], 4
      %s16 = int_to_ptr.vmem [resolvable:$true] %s15
      %18 = dma.hbm_to_vmem [thread:$0]  %s0, 256, %s16, [#allocation3]
    $region5: #{tpu_custom_call.1} parent=1 // pred_fallthru
      _
    // Predicated region
    $region6: #{tpu_custom_call.1} parent=1 // pred_check
      _
    $region7: #{tpu_custom_call.1} parent=1 // pred_check_branch
      %20 = sbr.rel (0) target = $region9
    $region8: #{tpu_custom_call.1} parent=1 // pred_region
      %21 = dma.done [#allocation3], 256
    $region9: #{tpu_custom_call.1} parent=1 // pred_fallthru
      _
    %v22 = vld [vmem:[#allocation2] sm:$0xff]
    %v23 = vld [vmem:[#allocation2 + $0x8] sm:$0xff]
    %v24 = vadd.f32 %v22, %v23
    %25 = vadd.xlane.f32.xlu0 %v24
    %v26 = vpop.xlane.xlu0 %25
    %v27 = vmul.f32 %v26, 0.00390625
    %v28 = vsub.f32 %v22, %v27
    %v29 = vsub.f32 %v23, %v27
    %v30 = vmul.f32 %v28, %v28
    %v31 = vmul.f32 %v29, %v29
    %v32 = vadd.f32 %v30, %v31
    %33 = vadd.xlane.f32.xlu0 %v32
    %v34 = vpop.xlane.xlu0 %33
    %v35 = vmul.f32 %v34, 0.003921569
    %vm36 = vcmask 7168
    %37 = vst.msk [vmem:[%s1] sm:$0xff] %vm36, %v27
    %38 = vst.msk [vmem:[%s2] sm:$0xff] %vm36, %v35
    // Predicated region
    $region10: #{tpu_custom_call.1} parent=1 // pred_check
      _
    $region11: #{tpu_custom_call.1} parent=1 // pred_check_branch
      %40 = sbr.rel (0) target = $region13
    $region12: #{tpu_custom_call.1} parent=1 // pred_region
      _
    $region13: #{tpu_custom_call.1} parent=1 // pred_fallthru
      _
    // Predicated region
    $region14: #{tpu_custom_call.1} parent=1 // pred_check
      _
    $region15: #{tpu_custom_call.1} parent=1 // pred_check_branch
      %42 = sbr.rel (0) target = $region17
    $region16: #{tpu_custom_call.1} parent=1 // pred_region
      _
    $region17: #{tpu_custom_call.1} parent=1 // pred_fallthru
      _
    // Predicated region
    $region18: #{tpu_custom_call.1} parent=1 // pred_check
      _
    $region19: #{tpu_custom_call.1} parent=1 // pred_check_branch
      %44 = sbr.rel (0) target = $region21
    $region20: #{tpu_custom_call.1} parent=1 // pred_region
      _
    $region21: #{tpu_custom_call.1} parent=1 // pred_fallthru
      _
    // Predicated region
    $region22: #{tpu_custom_call.1} parent=1 // pred_check
      _
    $region23: #{tpu_custom_call.1} parent=1 // pred_check_branch
      %46 = sbr.rel (0) target = $region25
    $region24: #{tpu_custom_call.1} parent=1 // pred_region
      _
    $region25: #{tpu_custom_call.1} parent=1 // pred_fallthru
      _
    %47 = vsyncpa [#allocation3], 1

</llo_original>
